<compile_context>
chip_gen: v7x
topology: tpu7x:2x2x1
jax: 0.10.0
libtpu: 0.0.40
codegen_flags: <defaults>
</compile_context>

<pallas_src>
import functools

import jax
import jax.numpy as jnp
from jax import lax
from jax.experimental import pallas as pl
from jax.experimental.pallas import tpu as pltpu

NUM_CLASSES = 15
FEAT_CH = 2048
MAX_TILE_HW = 512  # spatial rows per chunk (multiple of 8); 512*2048*4B = 4 MiB/row-block


def _head_kernel(feat_ref, w_ref, b_ref, out_ref, pooled_ref, *,
                 tile_hw, hw_total, n_slabs, needs_mask):
    """feat_ref: (TN, THW, C) native dtype, channels-last (C on lanes)
       w_ref:   (15, C) f32      b_ref: (1, 15) f32
       out_ref: (TN, 1, 15) f32  pooled_ref: (TN, 8|1, C) f32 running max."""
    j = pl.program_id(1)

    @pl.when(j == 0)
    def _init():
        pooled_ref[...] = jnp.full(pooled_ref.shape, -jnp.inf, pooled_ref.dtype)

    x = feat_ref[...]                                   # (TN, THW, C), native dtype
    if needs_mask:
        # Tail spatial chunk: mask rows beyond HW with -inf so padding never wins the max.
        valid = hw_total - j * tile_hw
        rows = lax.broadcasted_iota(jnp.int32, x.shape, 1)
        x = jnp.where(rows < valid, x, jnp.asarray(-jnp.inf, dtype=x.dtype))

    if n_slabs >= 2:
        # Accumulate in the input layout: running max over 8-sublane slabs is pure VPU
        # (no per-chunk XLU reduce, no relayout); slices are vreg-aligned.
        acc = x[:, 0:8, :]
        for s in range(1, n_slabs):
            acc = jnp.maximum(acc, x[:, 8 * s:8 * (s + 1), :])      # (TN, 8, C)
    else:
        acc = jnp.max(x, axis=1, keepdims=True)                      # (TN, 1, C)
    pooled_ref[...] = jnp.maximum(pooled_ref[...], acc.astype(jnp.float32))

    @pl.when(j == pl.num_programs(1) - 1)
    def _finalize():
        # Single cross-sublane reduce per batch tile, then 1x1 conv == matmul + bias.
        pooled = jnp.max(pooled_ref[...], axis=1)                    # (TN, C)
        logits = lax.dot_general(
            pooled, w_ref[...],
            dimension_numbers=(((1,), (1,)), ((), ())),              # contract on C
            preferred_element_type=jnp.float32) + b_ref[...]         # (TN, 15)
        m = jnp.max(logits, axis=-1, keepdims=True)
        shifted = logits - m
        lse = jnp.log(jnp.sum(jnp.exp(shifted), axis=-1, keepdims=True))
        out_ref[...] = (shifted - lse)[:, None, :]                   # (TN, 1, 15)


def _budgets():
    """(per-pipeline-buffer feature budget, vmem_limit cap) per TPU generation."""
    kind = ""
    try:
        kind = jax.devices()[0].device_kind.lower()
    except Exception:
        pass
    if "v7" in kind or "7x" in kind:
        return 10 << 20, 48 << 20        # v7x: 64 MiB physical VMEM -> stay well under
    return 16 << 20, 64 << 20            # v5e / v6e: 128 MiB physical VMEM


def net_head(features_nhwc, w_conv, b_conv):
    """features_nhwc: (N, H, W, 2048) trunk features, channels-last (any float dtype).
    w_conv: (15, 2048, 1, 1) PyTorch conv weight layout; b_conv: (15,).
    Returns log-softmax class scores of shape (N, 15), float32."""
    N, H, W, C = features_nhwc.shape
    assert C == FEAT_CH
    HW = H * W

    feat = features_nhwc.reshape(N, HW, C)              # free reshape, no cast
    itemsize = jnp.dtype(feat.dtype).itemsize

    w = w_conv.reshape(NUM_CLASSES, FEAT_CH).astype(jnp.float32)   # (15, 2048) lane-dense
    b = b_conv.reshape(1, NUM_CLASSES).astype(jnp.float32)         # (1, 15)

    per_buf_budget, vmem_cap = _budgets()

    # Spatial tile: full HW when small, else a bounded 512-row chunk (tail masked in-kernel).
    tile_hw = HW if HW <= MAX_TILE_HW else MAX_TILE_HW
    needs_mask = (HW % tile_hw) != 0
    n_slabs = tile_hw // 8 if tile_hw % 8 == 0 else 0
    pooled_sub = 8 if n_slabs >= 2 else 1

    # Batch tile: no sublane rounding (leading dim is unconstrained); keep the
    # double-buffered feature block within budget and ensure >=2 batch grid steps
    # whenever N >= 2 so v7x's two TensorCores both get work.
    padded_hw = -(-tile_hw // 8) * 8
    per_row = padded_hw * FEAT_CH * itemsize
    tile_n = max(1, int(per_buf_budget // per_row))
    tile_n = min(tile_n, N)
    if N >= 2:
        tile_n = min(tile_n, -(-N // 2))

    grid = (pl.cdiv(N, tile_n), pl.cdiv(HW, tile_hw))

    vmem_need = (2 * tile_n * padded_hw * FEAT_CH * itemsize   # feature double-buffer
                 + 2 * 16 * FEAT_CH * 4                        # weight (15->16 sublanes, 2 bufs)
                 + tile_n * 8 * FEAT_CH * 4                    # pooled running-max scratch
                 + (1 << 20))                                  # bias / logits / output slack
    vmem_limit = int(min(max(vmem_need + (8 << 20), 16 << 20), vmem_cap))

    cost = pl.CostEstimate(
        flops=int(N * FEAT_CH * HW + 2 * N * FEAT_CH * NUM_CLASSES),
        transcendentals=int(N * (NUM_CLASSES + 1)),
        bytes_accessed=int(N * FEAT_CH * HW * itemsize
                           + NUM_CLASSES * FEAT_CH * 4
                           + N * NUM_CLASSES * 4),
    )

    kernel = functools.partial(_head_kernel, tile_hw=tile_hw, hw_total=HW,
                               n_slabs=n_slabs, needs_mask=needs_mask)

    out = pl.pallas_call(
        kernel,
        out_shape=jax.ShapeDtypeStruct((N, 1, NUM_CLASSES), jnp.float32),
        grid=grid,
        in_specs=[
            pl.BlockSpec((tile_n, tile_hw, FEAT_CH), lambda i, j: (i, j, 0)),
            pl.BlockSpec((NUM_CLASSES, FEAT_CH), lambda i, j: (0, 0)),
            pl.BlockSpec((1, NUM_CLASSES), lambda i, j: (0, 0)),
        ],
        out_specs=pl.BlockSpec((tile_n, 1, NUM_CLASSES), lambda i, j: (i, 0, 0)),
        scratch_shapes=[pltpu.VMEM((tile_n, pooled_sub, FEAT_CH), jnp.float32)],
        compiler_params=pltpu.CompilerParams(
            dimension_semantics=("parallel", "arbitrary"),
            vmem_limit_bytes=vmem_limit),
        cost_estimate=cost,
    )(feat, w, b)
    return out.reshape(N, NUM_CLASSES)


if __name__ == "__main__":
    key = jax.random.PRNGKey(0)
    k_feat, k_w, k_b = jax.random.split(key, 3)

    # Small shapes consistent with the module: a (2, 3, 64, 64) image through the
    # resnet101 trunk yields (2, 2048, 2, 2) feature maps (NCHW in PyTorch).
    N, Hf, Wf = 2, 2, 2
    feat_nchw = jax.random.normal(k_feat, (N, FEAT_CH, Hf, Wf), dtype=jnp.float32)
    # The head kernel consumes channels-last features; in production the JAX backbone
    # emits NHWC natively — this transpose exists only to mimic the PyTorch layout.
    feat_nhwc = jnp.transpose(feat_nchw, (0, 2, 3, 1))

    # Deterministic init of final_conv = nn.Conv2d(2048, 15, 1) parameters.
    bound = 1.0 / (FEAT_CH ** 0.5)
    w_conv = jax.random.uniform(k_w, (NUM_CLASSES, FEAT_CH, 1, 1),
                                minval=-bound, maxval=bound, dtype=jnp.float32)
    b_conv = jax.random.uniform(k_b, (NUM_CLASSES,),
                                minval=-bound, maxval=bound, dtype=jnp.float32)

    out = jax.block_until_ready(net_head(feat_nhwc, w_conv, b_conv))
    assert out.shape == (N, NUM_CLASSES)

    # Pure-JAX reference on the original NCHW tensor: global max pool -> 1x1 conv -> log_softmax.
    pooled = jnp.max(feat_nchw.reshape(N, FEAT_CH, Hf * Wf), axis=-1)
    logits = pooled @ w_conv.reshape(NUM_CLASSES, FEAT_CH).T + b_conv
    ref = jax.nn.log_softmax(logits, axis=-1)
    assert bool(jnp.all(jnp.abs(out - ref) < 1e-4))

    # Sanity: log-softmax rows must sum (in prob space) to 1.
    row_sums = jnp.sum(jnp.exp(out), axis=-1)
    assert bool(jnp.all(jnp.abs(row_sums - 1.0) < 1e-4))

    print("KERNEL_OK")
</pallas_src>

<mosaic_0001>
module attributes {stable_mosaic.version = 11 : i64} {
  func.func @_head_kernel(%arg0: i32, %arg1: i32, %arg2: memref<1x4x2048xf32, #tpu.memory_space<vmem>>, %arg3: memref<15x2048xf32, #tpu.memory_space<vmem>>, %arg4: memref<1x15xf32, #tpu.memory_space<vmem>>, %arg5: memref<1x1x15xf32, #tpu.memory_space<vmem>>, %arg6: memref<1x1x2048xf32, #tpu.memory_space<vmem>>) attributes {dimension_semantics = [#tpu.dimension_semantics<parallel>, #tpu.dimension_semantics<arbitrary>], iteration_bounds = array<i64: 2, 1>, scalar_prefetch = 0 : i64, scratch_operands = 1 : i64, tpu.core_type = #tpu.core_type<tc>, window_params = [{transform_indices = @transform_0, window_bounds = array<i64: 1, 4, 2048>}, {pipeline_mode = #tpu.pipeline_mode<synchronous>, transform_indices = @transform_1, window_bounds = array<i64: 15, 2048>}, {pipeline_mode = #tpu.pipeline_mode<synchronous>, transform_indices = @transform_2, window_bounds = array<i64: 1, 15>}, {transform_indices = @transform_3, window_bounds = array<i64: 1, 1, 15>}]} {
    %c0_i32 = arith.constant 0 : i32
    %0 = arith.cmpi eq, %arg1, %c0_i32 : i32
    %1 = arith.extui %0 : i1 to i32
    %c0_i32_0 = arith.constant 0 : i32
    %2 = arith.cmpi ne, %1, %c0_i32_0 : i32
    scf.if %2 {
      %cst_11 = arith.constant 0xFF800000 : f32
      %12 = vector.broadcast %cst_11 : f32 to vector<1x1x2048xf32>
      %c0_12 = arith.constant 0 : index
      %c0_13 = arith.constant 0 : index
      %c0_14 = arith.constant 0 : index
      %13 = vector.load %arg6[%c0_12, %c0_13, %c0_14] : memref<1x1x2048xf32, #tpu.memory_space<vmem>>, vector<1x1x2048xf32>
      tpu.vector_store %arg6[%c0_12, %c0_13, %c0_14], %12 {strides = array<i32>} : memref<1x1x2048xf32, #tpu.memory_space<vmem>>, vector<1x1x2048xf32>,
    } else {
    }
    %c0 = arith.constant 0 : index
    %c0_1 = arith.constant 0 : index
    %c0_2 = arith.constant 0 : index
    %3 = vector.load %arg2[%c0, %c0_1, %c0_2] : memref<1x4x2048xf32, #tpu.memory_space<vmem>>, vector<1x4x2048xf32>
    %cst = arith.constant dense<0xFF800000> : vector<1x2048xf32>
    %4 = vector.multi_reduction <maximumf>, %3, %cst [1] : vector<1x4x2048xf32> to vector<1x2048xf32>
    %5 = vector.shape_cast %4 : vector<1x2048xf32> to vector<1x1x2048xf32>
    %c0_3 = arith.constant 0 : index
    %c0_4 = arith.constant 0 : index
    %c0_5 = arith.constant 0 : index
    %6 = vector.load %arg6[%c0_3, %c0_4, %c0_5] : memref<1x1x2048xf32, #tpu.memory_space<vmem>>, vector<1x1x2048xf32>
    %7 = arith.maximumf %6, %5 : vector<1x1x2048xf32>
    %c0_6 = arith.constant 0 : index
    %c0_7 = arith.constant 0 : index
    %c0_8 = arith.constant 0 : index
    %8 = vector.load %arg6[%c0_6, %c0_7, %c0_8] : memref<1x1x2048xf32, #tpu.memory_space<vmem>>, vector<1x1x2048xf32>
    tpu.vector_store %arg6[%c0_6, %c0_7, %c0_8], %7 {strides = array<i32>} : memref<1x1x2048xf32, #tpu.memory_space<vmem>>, vector<1x1x2048xf32>,
    %c0_i32_9 = arith.constant 0 : i32
    %9 = arith.cmpi eq, %arg1, %c0_i32_9 : i32
    %10 = arith.extui %9 : i1 to i32
    %c0_i32_10 = arith.constant 0 : i32
    %11 = arith.cmpi ne, %10, %c0_i32_10 : i32
    scf.if %11 {
      %c0_11 = arith.constant 0 : index
      %c0_12 = arith.constant 0 : index
      %c0_13 = arith.constant 0 : index
      %12 = vector.load %arg6[%c0_11, %c0_12, %c0_13] : memref<1x1x2048xf32, #tpu.memory_space<vmem>>, vector<1x1x2048xf32>
      %cst_14 = arith.constant dense<0xFF800000> : vector<1x2048xf32>
      %13 = vector.multi_reduction <maximumf>, %12, %cst_14 [1] : vector<1x1x2048xf32> to vector<1x2048xf32>
      %c0_15 = arith.constant 0 : index
      %c0_16 = arith.constant 0 : index
      %14 = vector.load %arg3[%c0_15, %c0_16] : memref<15x2048xf32, #tpu.memory_space<vmem>>, vector<15x2048xf32>
      %cst_17 = arith.constant dense<0.000000e+00> : vector<1x15xf32>
      %15 = tpu.matmul %13, %14, %cst_17 {dimension_numbers = #tpu.dot_dimension_numbers<[1], [1], [0], [0], [0, 0, 1, 0], [], []>} : vector<1x2048xf32>, vector<15x2048xf32>, vector<1x15xf32> -> vector<1x15xf32>
      %c0_18 = arith.constant 0 : index
      %c0_19 = arith.constant 0 : index
      %16 = vector.load %arg4[%c0_18, %c0_19] : memref<1x15xf32, #tpu.memory_space<vmem>>, vector<1x15xf32>
      %17 = arith.addf %15, %16 : vector<1x15xf32>
      %cst_20 = arith.constant dense<0xFF800000> : vector<1xf32>
      %18 = vector.multi_reduction <maximumf>, %17, %cst_20 [1] : vector<1x15xf32> to vector<1xf32>
      %19 = vector.shape_cast %18 : vector<1xf32> to vector<1x1xf32>
      %20 = vector.broadcast %19 : vector<1x1xf32> to vector<1x15xf32>
      %21 = arith.subf %17, %20 : vector<1x15xf32>
      %22 = math.exp %21 : vector<1x15xf32>
      %cst_21 = arith.constant dense<0.000000e+00> : vector<1xf32>
      %23 = vector.multi_reduction <add>, %22, %cst_21 [1] : vector<1x15xf32> to vector<1xf32>
      %24 = vector.shape_cast %23 : vector<1xf32> to vector<1x1xf32>
      %25 = math.log %24 : vector<1x1xf32>
      %26 = vector.broadcast %25 : vector<1x1xf32> to vector<1x15xf32>
      %27 = arith.subf %21, %26 : vector<1x15xf32>
      %28 = vector.shape_cast %27 : vector<1x15xf32> to vector<1x1x15xf32>
      %c0_22 = arith.constant 0 : index
      %c0_23 = arith.constant 0 : index
      %c0_24 = arith.constant 0 : index
      %29 = vector.load %arg5[%c0_22, %c0_23, %c0_24] : memref<1x1x15xf32, #tpu.memory_space<vmem>>, vector<1x1x15xf32>
      tpu.vector_store %arg5[%c0_22, %c0_23, %c0_24], %28 {strides = array<i32>} : memref<1x1x15xf32, #tpu.memory_space<vmem>>, vector<1x1x15xf32>,
    } else {
    }
    return
  }
  func.func @transform_0(%arg0: i32, %arg1: i32) -> (i32, i32, i32) {
    %c0_i32 = arith.constant 0 : i32
    %c0_i32_0 = arith.constant 0 : i32
    return %arg0, %arg1, %c0_i32 : i32, i32, i32
  }
  func.func @transform_1(%arg0: i32, %arg1: i32) -> (i32, i32) {
    %c0_i32 = arith.constant 0 : i32
    %c0_i32_0 = arith.constant 0 : i32
    %c0_i32_1 = arith.constant 0 : i32
    return %c0_i32, %c0_i32_0 : i32, i32
  }
  func.func @transform_2(%arg0: i32, %arg1: i32) -> (i32, i32) {
    %c0_i32 = arith.constant 0 : i32
    %c0_i32_0 = arith.constant 0 : i32
    %c0_i32_1 = arith.constant 0 : i32
    return %c0_i32, %c0_i32_0 : i32, i32
  }
  func.func @transform_3(%arg0: i32, %arg1: i32) -> (i32, i32, i32) {
    %c0_i32 = arith.constant 0 : i32
    %c0_i32_0 = arith.constant 0 : i32
    %c0_i32_1 = arith.constant 0 : i32
    return %arg0, %c0_i32, %c0_i32_0 : i32, i32, i32
  }
}

</mosaic_0001>

<llo_original>
// kernel: tpu_custom_call.1
$region0: #{tpu_custom_call.1}
  #allocation0 [shape = 'u32[]', space=smem, size = 0x4, offset = 0x4, fixed_abs, tag = 'smem constant byte address 0x4 - core index']
  #allocation1 [shape = 'u32[144,128]{1,0:T(1,128)}', space=vmem, size = 0x12000, scoped, tag = 'internal scratch']
  #allocation2 [shape = 'f32[1,1,2048]{2,1,0:T(1,128)}', space=vmem, size = 0x2000, scoped, tag = 'scratch operand']
  %s0 = inlined_call_operand.hbm [shape: f32[2,4,2048], index: 0, kind: input, shape index: {}]
  %s1 = inlined_call_operand.hbm [shape: f32[15,2048], index: 1, kind: input, shape index: {}]
  %s2 = inlined_call_operand.vmem [shape: f32[1,15], index: 2, kind: input, shape index: {}]
  %s3 = inlined_call_operand.hbm [shape: f32[2,1,15], index: 3, kind: output, shape index: {}]
  %s4 = sld [smem:[#allocation0]]
  $region61: #{tpu_custom_call.1} parent=0
    _
  %s6 = ssub.s32 1, %s4
  %s7 = scalar_select 0, %s6, %s4
  $region1: #{tpu_custom_call.1} parent=0
    #allocation3 [shape = 'u8[65536]{0}', space=vmem, size = 0x10000, scoped, tag = 'input window, operand 0']
    #allocation4 [shape = 's32[2]{0}', space=sflag, size = 0x8, scoped, tag = 'scoped memory for tpu_custom_call.1']
    #allocation5 [shape = 's32[2]{0}', space=sflag, size = 0x8, scoped, tag = 'scoped memory for tpu_custom_call.1']
    #allocation6 [shape = 'u8[131072]{0}', space=vmem, size = 0x20000, scoped, tag = 'input window, operand 1, single buffered']
    #allocation7 [shape = 's32[1]{0}', space=sflag, size = 0x4, scoped, tag = 'scoped memory for tpu_custom_call.1']
    #allocation8 [shape = 'u8[1024]{0}', space=vmem, size = 0x400, scoped, tag = 'output window, operand 0']
    %8 = vsyncpa [#allocation4], 0
    %s9 = scalar_lea.sflag [#allocation4], 1
    %10 = vsyncpa %s9, 0
    %11 = vsyncpa [#allocation7], 0
    %12 = vsyncpa [#allocation5], 0
    %s13 = scalar_lea.sflag [#allocation5], 1
    %14 = vsyncpa %s13, 0
    loop: start=0, step=1, limit=4
    $region2: #{tpu_custom_call.1} parent=1 // loop_pre_header
      _
    $region3: #{tpu_custom_call.1} parent=1 // loop_header
      %s16 = sphi 0, %s20
      %p17 = scmp.ge.s32.totalorder %s16, 4
      %s23 = sphi 0, %s35
      %s24 = sphi 0, %s31
      %s25 = sphi 0, %s23
      %s26 = sphi 0, %s24
      %s27 = sphi 0, %s25
      %s28 = sphi 0, %s26
      %s40 = sphi 0, %s42
      %s43 = sphi 0, %s40
      %s44 = sphi 0, %s43
      %s60 = sphi 0, %s44
      %s64 = sphi 0, %s64
      %s66 = sphi 0, %s64
      %s67 = sphi 0, %s66
      %s81 = sphi 0, %s67
      %s85 = sphi 0, %s85
      %s87 = sphi 0, %s85
      %s88 = sphi 0, %s87
      %s102 = sphi 0, %s88
      %s108 = sphi 0, %s110
      %s111 = sphi 0, %s108
      %s112 = sphi 0, %s111
      %s128 = sphi 0, %s112
    $region4: #{tpu_custom_call.1} parent=1 // loop_header_branch
      %19 = sbr.rel (%p17) target = $region8
    $region5: #{tpu_custom_call.1} parent=1 // loop_body
      %s21 = ssub.s32 %s16, 1
      %s22 = ssub.s32 %s16, 2
      %s29 = sadd.s32 1, %s24
      %p30 = scmp.ge.s32.totalorder %s29, 1
      %s31 = scalar_select %p30, 0, %s29
      %s32 = sadd.s32 1, %s23
      %s33 = scalar_select %p30, %s32, %s23
      %p34 = scmp.ge.s32.totalorder %s33, 2
      %s35 = scalar_select %p34, 0, %s33
      %s36 = ssub.s32 %s23, %s35
      %s37 = ssub.s32 %s24, %s31
      %s38 = sor.u32 %s36, %s37
      %p39 = scmp.eq.s32.totalorder %s38, 0
      %s41 = sadd.s32 %s40, 1
      %s42 = scalar_select %p39, %s40, %s41
      %p45 = pneg %p39
      %p46 = scmp.eq.s32.totalorder %s16, 1
      %p47 = por %p45, %p46
      %p48 = scmp.ne.s32.totalorder %s40, %s43
      %p49 = scmp.eq.s32.totalorder %s16, 0
      %p50 = por %p48, %p49
      %p51 = scmp.ne.s32.totalorder %s40, %s43
      %p52 = scmp.eq.s32.totalorder %s21, 1
      %p53 = por %p51, %p52
      %p54 = scmp.ne.s32.totalorder %s43, %s44
      %p55 = scmp.eq.s32.totalorder %s21, 0
      %p56 = por %p54, %p55
      %p57 = scmp.ne.s32.totalorder %s43, %s44
      %p58 = scmp.eq.s32.totalorder %s22, 1
      %p59 = por %p57, %p58
      %p61 = scmp.ne.s32.totalorder %s44, %s60
      %p62 = scmp.eq.s32.totalorder %s22, 0
      %p63 = por %p61, %p62
      %s65 = sadd.s32 %s64, 1
      %p68 = scmp.eq.s32.totalorder %s16, 1
      %p69 = scmp.ne.s32.totalorder %s64, %s66
      %p70 = scmp.eq.s32.totalorder %s16, 0
      %p71 = por %p69, %p70
      %p72 = scmp.ne.s32.totalorder %s64, %s66
      %p73 = scmp.eq.s32.totalorder %s21, 1
      %p74 = por %p72, %p73
      %p75 = scmp.ne.s32.totalorder %s66, %s67
      %p76 = scmp.eq.s32.totalorder %s21, 0
      %p77 = por %p75, %p76
      %p78 = scmp.ne.s32.totalorder %s66, %s67
      %p79 = scmp.eq.s32.totalorder %s22, 1
      %p80 = por %p78, %p79
      %p82 = scmp.ne.s32.totalorder %s67, %s81
      %p83 = scmp.eq.s32.totalorder %s22, 0
      %p84 = por %p82, %p83
      %s86 = sadd.s32 %s85, 1
      %p89 = scmp.eq.s32.totalorder %s16, 1
      %p90 = scmp.ne.s32.totalorder %s85, %s87
      %p91 = scmp.eq.s32.totalorder %s16, 0
      %p92 = por %p90, %p91
      %p93 = scmp.ne.s32.totalorder %s85, %s87
      %p94 = scmp.eq.s32.totalorder %s21, 1
      %p95 = por %p93, %p94
      %p96 = scmp.ne.s32.totalorder %s87, %s88
      %p97 = scmp.eq.s32.totalorder %s21, 0
      %p98 = por %p96, %p97
      %p99 = scmp.ne.s32.totalorder %s87, %s88
      %p100 = scmp.eq.s32.totalorder %s22, 1
      %p101 = por %p99, %p100
      %p103 = scmp.ne.s32.totalorder %s88, %s102
      %p104 = scmp.eq.s32.totalorder %s22, 0
      %p105 = por %p103, %p104
      %s106 = ssub.s32 %s23, %s35
      %p107 = scmp.eq.s32.totalorder %s106, 0
      %s109 = sadd.s32 %s108, 1
      %s110 = scalar_select %p107, %s108, %s109
      %p113 = pneg %p107
      %p114 = scmp.eq.s32.totalorder %s16, 1
      %p115 = por %p113, %p114
      %p116 = scmp.ne.s32.totalorder %s108, %s111
      %p117 = scmp.eq.s32.totalorder %s16, 0
      %p118 = por %p116, %p117
      %p119 = scmp.ne.s32.totalorder %s108, %s111
      %p120 = scmp.eq.s32.totalorder %s21, 1
      %p121 = por %p119, %p120
      %p122 = scmp.ne.s32.totalorder %s111, %s112
      %p123 = scmp.eq.s32.totalorder %s21, 0
      %p124 = por %p122, %p123
      %p125 = scmp.ne.s32.totalorder %s111, %s112
      %p126 = scmp.eq.s32.totalorder %s22, 1
      %p127 = por %p125, %p126
      %p129 = scmp.ne.s32.totalorder %s112, %s128
      %p130 = scmp.eq.s32.totalorder %s22, 0
      %p131 = por %p129, %p130
      %p132 = scmp.le.s32.totalorder 1, %s16
      %p133 = scmp.lt.s32.totalorder %s16, 3
      %p134 = pnand %p132, %p133
      %p135 = pneg %p134
      // Predicated region
      $region9: #{tpu_custom_call.1} parent=5 // pred_check
        _
      $region10: #{tpu_custom_call.1} parent=5 // pred_check_branch
        %137 = sbr.rel (%p134) target = $region12
      $region11: #{tpu_custom_call.1} parent=5 // pred_region
        %s138 = ssub.s32 %s16, 1
        // Predicated region
        $region13: #{tpu_custom_call.1} parent=11 // pred_check
          %p139 = pneg %p77
        $region14: #{tpu_custom_call.1} parent=11 // pred_check_branch
          %141 = sbr.rel (%p139) target = $region16
        $region15: #{tpu_custom_call.1} parent=11 // pred_region
          %s143 = ssub.s32 4096, 4096
          %144 = vsyncadd [#allocation7], %s143
          %s145 = sshll.u32 [#allocation6], 4
          %s146 = int_to_ptr.vmem [resolvable:$true] %s145
          %151 = dma.hbm_to_vmem [thread:$0]  %s1, 4096, %s146, [#allocation7], 2048, 2048, 128
        $region16: #{tpu_custom_call.1} parent=11 // pred_fallthru
          _
        // Predicated region
        $region17: #{tpu_custom_call.1} parent=11 // pred_check
          %p152 = pneg %p98
        $region18: #{tpu_custom_call.1} parent=11 // pred_check_branch
          %154 = sbr.rel (%p152) target = $region20
        $region19: #{tpu_custom_call.1} parent=11 // pred_region
          _
        $region20: #{tpu_custom_call.1} parent=11 // pred_fallthru
          _
      $region12: #{tpu_custom_call.1} parent=5 // pred_fallthru
        _
      %p155 = scmp.lt.s32.totalorder %s16, 2
      // Predicated region
      $region21: #{tpu_custom_call.1} parent=5 // pred_check
        %p156 = pneg %p155
      $region22: #{tpu_custom_call.1} parent=5 // pred_check_branch
        %158 = sbr.rel (%p156) target = $region24
      $region23: #{tpu_custom_call.1} parent=5 // pred_region
        // Predicated region
        $region25: #{tpu_custom_call.1} parent=23 // pred_check
          %p159 = pneg %p50
        $region26: #{tpu_custom_call.1} parent=23 // pred_check_branch
          %161 = sbr.rel (%p159) target = $region28
        $region27: #{tpu_custom_call.1} parent=23 // pred_region
          %s162 = sand.u32 %s40, 1
          %s163 = scalar_lea.sflag [#allocation4], %s162
          %s164 = sand.u32 %s40, 1
          %s165 = smul.addr %s164, 64
          %s166 = scalar_lea.vmem [#allocation3], %s165
          %s168 = ssub.s32 1024, 1024
          %169 = vsyncadd %s163, %s168
          %s170 = smul.addr %s24, 16
          %s171 = smul.addr %s23, 16
          %s172 = sadd.s32 %s170, %s171
          %s173 = smul.addr %s172, 64
          %s174 = scalar_lea.hbm %s0, %s173
          %s176 = sshll.u32 %s166, 4
          %s177 = int_to_ptr.vmem [resolvable:$true] %s176
          %179 = dma.hbm_to_vmem [thread:$0]  %s174, 1024, %s177, %s163
        $region28: #{tpu_custom_call.1} parent=23 // pred_fallthru
          _
      $region24: #{tpu_custom_call.1} parent=5 // pred_fallthru
        _
      %p180 = scmp.le.s32.totalorder 1, %s16
      %p181 = scmp.lt.s32.totalorder %s16, 3
      %p182 = pnand %p180, %p181
      %p183 = pneg %p182
      // Predicated region
      $region29: #{tpu_custom_call.1} parent=5 // pred_check
        _
      $region30: #{tpu_custom_call.1} parent=5 // pred_check_branch
        %185 = sbr.rel (%p182) target = $region32
      $region31: #{tpu_custom_call.1} parent=5 // pred_region
        %s186 = ssub.s32 %s16, 1
        %s187 = sand.u32 %s43, 1
        %s188 = scalar_lea.sflag [#allocation4], %s187
        %s189 = sand.u32 %s43, 1
        %s190 = smul.addr %s189, 64
        %s191 = scalar_lea.vmem [#allocation3], %s190
        // Predicated region
        $region33: #{tpu_custom_call.1} parent=31 // pred_check
          %p192 = pneg %p56
        $region34: #{tpu_custom_call.1} parent=31 // pred_check_branch
          %194 = sbr.rel (%p192) target = $region36
        $region35: #{tpu_custom_call.1} parent=31 // pred_region
          %195 = dma.done %s188, 1024
        $region36: #{tpu_custom_call.1} parent=31 // pred_fallthru
          _
        // Predicated region
        $region37: #{tpu_custom_call.1} parent=31 // pred_check
          %p196 = pneg %p77
        $region38: #{tpu_custom_call.1} parent=31 // pred_check_branch
          %198 = sbr.rel (%p196) target = $region40
        $region39: #{tpu_custom_call.1} parent=31 // pred_region
          %199 = dma.done [#allocation7], 4096
        $region40: #{tpu_custom_call.1} parent=31 // pred_fallthru
          _
        %s200 = sand.u32 %s43, 1
        %s201 = scalar_lea.sflag [#allocation4], %s200
        %s202 = sand.u32 %s43, 1
        %s203 = smul.addr %s202, 64
        %s204 = scalar_lea.vmem [#allocation3], %s203
        %p205 = pneg %p56
        %p206 = pneg %p53
        %p207 = pneg %p77
        %p208 = pneg %p74
        %p209 = pneg %p98
        %p210 = pneg %p95
        %p211 = pneg %p124
        %p212 = pneg %p121
        %s213 = sand.u32 %s111, 1
        %s214 = scalar_lea.sflag [#allocation5], %s213
        %s215 = sand.u32 %s111, 1
        %s216 = scalar_lea.vmem [#allocation8], %s215
        %p217 = scmp.eq.s32.totalorder %s26, 0
        // Predicated region
        $region41: #{tpu_custom_call.1} parent=31 // pred_check
          %p218 = pneg %p217
        $region42: #{tpu_custom_call.1} parent=31 // pred_check_branch
          %220 = sbr.rel (%p218) target = $region44
        $region43: #{tpu_custom_call.1} parent=31 // pred_region
          %221 = vst [vmem:[#allocation2] sm:$0xff] -inf
          %222 = vst [vmem:[#allocation2 + $0x8] sm:$0xff] -inf
        $region44: #{tpu_custom_call.1} parent=31 // pred_fallthru
          _
        %v223 = vld [vmem:[%s191] sm:$0xff]
        %v224 = vld [vmem:[%s191 + $0x8] sm:$0xff]
        %v225 = vld [vmem:[%s191 + $0x10] sm:$0xff]
        %v226 = vld [vmem:[%s191 + $0x18] sm:$0xff]
        %v227 = vld [vmem:[%s191 + $0x20] sm:$0xff]
        %v228 = vld [vmem:[%s191 + $0x28] sm:$0xff]
        %v229 = vld [vmem:[%s191 + $0x30] sm:$0xff]
        %v230 = vld [vmem:[%s191 + $0x38] sm:$0xff]
        %v239 = vcombine.high %v223, %v223
        %v240 = vcombine.high %v224, %v224
        %v241 = vcombine.high %v225, %v225
        %v242 = vcombine.high %v226, %v226
        %v243 = vcombine.high %v227, %v227
        %v244 = vcombine.high %v228, %v228
        %v245 = vcombine.high %v229, %v229
        %v246 = vcombine.high %v230, %v230
        %vm255 = vcmask 1043456
        %v256 = vsel %vm255, %v223, -inf
        %v257 = vrot.slane %v256, 4
        %v258 = vmax.f32 %v256, %v257
        %v259 = vrot.slane %v258, 2
        %v260 = vmax.f32 %v258, %v259
        %v261 = vrot.slane %v260, 1
        %v262 = vmax.f32 %v260, %v261
        %v263 = vsel %vm255, %v239, -inf
        %v264 = vrot.slane %v263, 4
        %v265 = vmax.f32 %v263, %v264
        %v266 = vrot.slane %v265, 2
        %v267 = vmax.f32 %v265, %v266
        %v268 = vrot.slane %v267, 1
        %v269 = vmax.f32 %v267, %v268
        %v270 = vsel %vm255, %v224, -inf
        %v271 = vrot.slane %v270, 4
        %v272 = vmax.f32 %v270, %v271
        %v273 = vrot.slane %v272, 2
        %v274 = vmax.f32 %v272, %v273
        %v275 = vrot.slane %v274, 1
        %v276 = vmax.f32 %v274, %v275
        %v277 = vsel %vm255, %v240, -inf
        %v278 = vrot.slane %v277, 4
        %v279 = vmax.f32 %v277, %v278
        %v280 = vrot.slane %v279, 2
        %v281 = vmax.f32 %v279, %v280
        %v282 = vrot.slane %v281, 1
        %v283 = vmax.f32 %v281, %v282
        %v284 = vsel %vm255, %v225, -inf
        %v285 = vrot.slane %v284, 4
        %v286 = vmax.f32 %v284, %v285
        %v287 = vrot.slane %v286, 2
        %v288 = vmax.f32 %v286, %v287
        %v289 = vrot.slane %v288, 1
        %v290 = vmax.f32 %v288, %v289
        %v291 = vsel %vm255, %v241, -inf
        %v292 = vrot.slane %v291, 4
        %v293 = vmax.f32 %v291, %v292
        %v294 = vrot.slane %v293, 2
        %v295 = vmax.f32 %v293, %v294
        %v296 = vrot.slane %v295, 1
        %v297 = vmax.f32 %v295, %v296
        %v298 = vsel %vm255, %v226, -inf
        %v299 = vrot.slane %v298, 4
        %v300 = vmax.f32 %v298, %v299
        %v301 = vrot.slane %v300, 2
        %v302 = vmax.f32 %v300, %v301
        %v303 = vrot.slane %v302, 1
        %v304 = vmax.f32 %v302, %v303
        %v305 = vsel %vm255, %v242, -inf
        %v306 = vrot.slane %v305, 4
        %v307 = vmax.f32 %v305, %v306
        %v308 = vrot.slane %v307, 2
        %v309 = vmax.f32 %v307, %v308
        %v310 = vrot.slane %v309, 1
        %v311 = vmax.f32 %v309, %v310
        %v312 = vsel %vm255, %v227, -inf
        %v313 = vrot.slane %v312, 4
        %v314 = vmax.f32 %v312, %v313
        %v315 = vrot.slane %v314, 2
        %v316 = vmax.f32 %v314, %v315
        %v317 = vrot.slane %v316, 1
        %v318 = vmax.f32 %v316, %v317
        %v319 = vsel %vm255, %v243, -inf
        %v320 = vrot.slane %v319, 4
        %v321 = vmax.f32 %v319, %v320
        %v322 = vrot.slane %v321, 2
        %v323 = vmax.f32 %v321, %v322
        %v324 = vrot.slane %v323, 1
        %v325 = vmax.f32 %v323, %v324
        %v326 = vsel %vm255, %v228, -inf
        %v327 = vrot.slane %v326, 4
        %v328 = vmax.f32 %v326, %v327
        %v329 = vrot.slane %v328, 2
        %v330 = vmax.f32 %v328, %v329
        %v331 = vrot.slane %v330, 1
        %v332 = vmax.f32 %v330, %v331
        %v333 = vsel %vm255, %v244, -inf
        %v334 = vrot.slane %v333, 4
        %v335 = vmax.f32 %v333, %v334
        %v336 = vrot.slane %v335, 2
        %v337 = vmax.f32 %v335, %v336
        %v338 = vrot.slane %v337, 1
        %v339 = vmax.f32 %v337, %v338
        %v340 = vsel %vm255, %v229, -inf
        %v341 = vrot.slane %v340, 4
        %v342 = vmax.f32 %v340, %v341
        %v343 = vrot.slane %v342, 2
        %v344 = vmax.f32 %v342, %v343
        %v345 = vrot.slane %v344, 1
        %v346 = vmax.f32 %v344, %v345
        %v347 = vsel %vm255, %v245, -inf
        %v348 = vrot.slane %v347, 4
        %v349 = vmax.f32 %v347, %v348
        %v350 = vrot.slane %v349, 2
        %v351 = vmax.f32 %v349, %v350
        %v352 = vrot.slane %v351, 1
        %v353 = vmax.f32 %v351, %v352
        %v354 = vsel %vm255, %v230, -inf
        %v355 = vrot.slane %v354, 4
        %v356 = vmax.f32 %v354, %v355
        %v357 = vrot.slane %v356, 2
        %v358 = vmax.f32 %v356, %v357
        %v359 = vrot.slane %v358, 1
        %v360 = vmax.f32 %v358, %v359
        %v361 = vsel %vm255, %v246, -inf
        %v362 = vrot.slane %v361, 4
        %v363 = vmax.f32 %v361, %v362
        %v364 = vrot.slane %v363, 2
        %v365 = vmax.f32 %v363, %v364
        %v366 = vrot.slane %v365, 1
        %v367 = vmax.f32 %v365, %v366
        %v368 = vld [vmem:[#allocation2] sm:$0xff]
        %v369 = vld [vmem:[#allocation2 + $0x8] sm:$0xff]
        %v386 = vcombine.low %v262, %v269
        %v387 = vcombine.low %v276, %v283
        %v388 = vcombine.low %v290, %v297
        %v389 = vcombine.low %v304, %v311
        %v391 = vunpack.c.l.s4 1966171168
        %v392 = vunpack.c.0.s8 %v391
        %v393 = vlaneseq
        %v394 = vshrl.u32 %v393, 7
        %v395 = vsub.s32 %v392, %v394
        %v396 = vrot.slane %v386, %v395
        %v398 = vunpack.c.l.s4 1966171168
        %v399 = vunpack.c.0.s8 %v398
        %v400 = vlaneseq
        %v401 = vshrl.u32 %v400, 7
        %v402 = vsub.s32 %v399, %v401
        %v403 = vrot.slane %v387, %v402
        %v405 = vunpack.c.l.s4 1966171168
        %v406 = vunpack.c.0.s8 %v405
        %v407 = vlaneseq
        %v408 = vshrl.u32 %v407, 7
        %v409 = vsub.s32 %v406, %v408
        %v410 = vrot.slane %v388, %v409
        %v412 = vunpack.c.l.s4 1966171168
        %v413 = vunpack.c.0.s8 %v412
        %v414 = vlaneseq
        %v415 = vshrl.u32 %v414, 7
        %v416 = vsub.s32 %v413, %v415
        %v417 = vrot.slane %v389, %v416
        %v418 = vcombine.low %v396, %v403
        %v419 = vcombine.low %v410, %v417
        %v421 = vunpack.c.l.s4 1966171168
        %v422 = vunpack.c.0.s8 %v421
        %v423 = vlaneseq
        %v424 = vshrl.u32 %v423, 7
        %v425 = vsub.s32 %v422, %v424
        %v426 = vrot.slane %v418, %v425
        %v428 = vunpack.c.l.s4 1966171168
        %v429 = vunpack.c.0.s8 %v428
        %v430 = vlaneseq
        %v431 = vshrl.u32 %v430, 7
        %v432 = vsub.s32 %v429, %v431
        %v433 = vrot.slane %v419, %v432
        %v434 = vcombine.low %v426, %v433
        %v435 = vcombine.low %v318, %v325
        %v436 = vcombine.low %v332, %v339
        %v437 = vcombine.low %v346, %v353
        %v438 = vcombine.low %v360, %v367
        %v440 = vunpack.c.l.s4 1966171168
        %v441 = vunpack.c.0.s8 %v440
        %v442 = vlaneseq
        %v443 = vshrl.u32 %v442, 7
        %v444 = vsub.s32 %v441, %v443
        %v445 = vrot.slane %v435, %v444
        %v447 = vunpack.c.l.s4 1966171168
        %v448 = vunpack.c.0.s8 %v447
        %v449 = vlaneseq
        %v450 = vshrl.u32 %v449, 7
        %v451 = vsub.s32 %v448, %v450
        %v452 = vrot.slane %v436, %v451
        %v454 = vunpack.c.l.s4 1966171168
        %v455 = vunpack.c.0.s8 %v454
        %v456 = vlaneseq
        %v457 = vshrl.u32 %v456, 7
        %v458 = vsub.s32 %v455, %v457
        %v459 = vrot.slane %v437, %v458
        %v461 = vunpack.c.l.s4 1966171168
        %v462 = vunpack.c.0.s8 %v461
        %v463 = vlaneseq
        %v464 = vshrl.u32 %v463, 7
        %v465 = vsub.s32 %v462, %v464
        %v466 = vrot.slane %v438, %v465
        %v467 = vcombine.low %v445, %v452
        %v468 = vcombine.low %v459, %v466
        %v470 = vunpack.c.l.s4 1966171168
        %v471 = vunpack.c.0.s8 %v470
        %v472 = vlaneseq
        %v473 = vshrl.u32 %v472, 7
        %v474 = vsub.s32 %v471, %v473
        %v475 = vrot.slane %v467, %v474
        %v477 = vunpack.c.l.s4 1966171168
        %v478 = vunpack.c.0.s8 %v477
        %v479 = vlaneseq
        %v480 = vshrl.u32 %v479, 7
        %v481 = vsub.s32 %v478, %v480
        %v482 = vrot.slane %v468, %v481
        %v483 = vcombine.low %v475, %v482
        %v486 = vmax.f32 %v368, %v434
        %v487 = vmax.f32 %v369, %v483
        %488 = vst [vmem:[#allocation2] sm:$0xff] %v486
        %489 = vst [vmem:[#allocation2 + $0x8] sm:$0xff] %v487
        // Predicated region
        $region45: #{tpu_custom_call.1} parent=31 // pred_check
          %p490 = pneg %p217
        $region46: #{tpu_custom_call.1} parent=31 // pred_check_branch
          %492 = sbr.rel (%p490) target = $region48
        $region47: #{tpu_custom_call.1} parent=31 // pred_region
          %v493 = vld [vmem:[#allocation2] sm:$0xff]
          %v494 = vld [vmem:[#allocation2 + $0x8] sm:$0xff]
          %v495 = vld [vmem:[#allocation6] sm:$0xff]
          %v496 = vld [vmem:[#allocation6 + $0x8] sm:$0xff]
          %v497 = vld [vmem:[#allocation6 + $0x10] sm:$0xff]
          %v498 = vld [vmem:[#allocation6 + $0x18] sm:$0xff]
          %v499 = vld [vmem:[#allocation6 + $0x20] sm:$0xff]
          %v500 = vld [vmem:[#allocation6 + $0x28] sm:$0xff]
          %v501 = vld [vmem:[#allocation6 + $0x30] sm:$0xff]
          %v502 = vld [vmem:[#allocation6 + $0x38] sm:$0xff]
          %v503 = vld [vmem:[#allocation6 + $0x40] sm:$0xff]
          %v504 = vld [vmem:[#allocation6 + $0x48] sm:$0xff]
          %v505 = vld [vmem:[#allocation6 + $0x50] sm:$0xff]
          %v506 = vld [vmem:[#allocation6 + $0x58] sm:$0xff]
          %v507 = vld [vmem:[#allocation6 + $0x60] sm:$0xff]
          %v508 = vld [vmem:[#allocation6 + $0x68] sm:$0xff]
          %v509 = vld [vmem:[#allocation6 + $0x70] sm:$0xff]
          %v510 = vld [vmem:[#allocation6 + $0x78] sm:$0xff]
          %v511 = vld [vmem:[#allocation6 + $0x80] sm:$0x7f]
          %v512 = vld [vmem:[#allocation6 + $0x88] sm:$0x7f]
          %v513 = vld [vmem:[#allocation6 + $0x90] sm:$0x7f]
          %v514 = vld [vmem:[#allocation6 + $0x98] sm:$0x7f]
          %v515 = vld [vmem:[#allocation6 + $0xa0] sm:$0x7f]
          %v516 = vld [vmem:[#allocation6 + $0xa8] sm:$0x7f]
          %v517 = vld [vmem:[#allocation6 + $0xb0] sm:$0x7f]
          %v518 = vld [vmem:[#allocation6 + $0xb8] sm:$0x7f]
          %v519 = vld [vmem:[#allocation6 + $0xc0] sm:$0x7f]
          %v520 = vld [vmem:[#allocation6 + $0xc8] sm:$0x7f]
          %v521 = vld [vmem:[#allocation6 + $0xd0] sm:$0x7f]
          %v522 = vld [vmem:[#allocation6 + $0xd8] sm:$0x7f]
          %v523 = vld [vmem:[#allocation6 + $0xe0] sm:$0x7f]
          %v524 = vld [vmem:[#allocation6 + $0xe8] sm:$0x7f]
          %v525 = vld [vmem:[#allocation6 + $0xf0] sm:$0x7f]
          %v526 = vld [vmem:[#allocation6 + $0xf8] sm:$0x7f]
          %v527 = vld [vmem:[%s2] sm:$0x1]
          %v530 = vlaneseq
          %v531 = vshrl.u32 %v530, 7
          %v532 = vsub.s32 0, %v531
          %v533 = vrot.slane %v493, %v532
          %v534 = vlaneseq
          %v535 = vshrl.u32 %v534, 7
          %v536 = vsub.s32 1, %v535
          %v537 = vrot.slane %v493, %v536
          %v538 = vlaneseq
          %v539 = vshrl.u32 %v538, 7
          %v540 = vsub.s32 2, %v539
          %v541 = vrot.slane %v493, %v540
          %v542 = vlaneseq
          %v543 = vshrl.u32 %v542, 7
          %v544 = vsub.s32 3, %v543
          %v545 = vrot.slane %v493, %v544
          %v546 = vlaneseq
          %v547 = vshrl.u32 %v546, 7
          %v548 = vsub.s32 4, %v547
          %v549 = vrot.slane %v493, %v548
          %v550 = vlaneseq
          %v551 = vshrl.u32 %v550, 7
          %v552 = vsub.s32 5, %v551
          %v553 = vrot.slane %v493, %v552
          %v554 = vlaneseq
          %v555 = vshrl.u32 %v554, 7
          %v556 = vsub.s32 6, %v555
          %v557 = vrot.slane %v493, %v556
          %v558 = vlaneseq
          %v559 = vshrl.u32 %v558, 7
          %v560 = vsub.s32 7, %v559
          %v561 = vrot.slane %v493, %v560
          %v562 = vlaneseq
          %v563 = vshrl.u32 %v562, 7
          %v564 = vsub.s32 0, %v563
          %v565 = vrot.slane %v494, %v564
          %v566 = vlaneseq
          %v567 = vshrl.u32 %v566, 7
          %v568 = vsub.s32 1, %v567
          %v569 = vrot.slane %v494, %v568
          %v570 = vlaneseq
          %v571 = vshrl.u32 %v570, 7
          %v572 = vsub.s32 2, %v571
          %v573 = vrot.slane %v494, %v572
          %v574 = vlaneseq
          %v575 = vshrl.u32 %v574, 7
          %v576 = vsub.s32 3, %v575
          %v577 = vrot.slane %v494, %v576
          %v578 = vlaneseq
          %v579 = vshrl.u32 %v578, 7
          %v580 = vsub.s32 4, %v579
          %v581 = vrot.slane %v494, %v580
          %v582 = vlaneseq
          %v583 = vshrl.u32 %v582, 7
          %v584 = vsub.s32 5, %v583
          %v585 = vrot.slane %v494, %v584
          %v586 = vlaneseq
          %v587 = vshrl.u32 %v586, 7
          %v588 = vsub.s32 6, %v587
          %v589 = vrot.slane %v494, %v588
          %v590 = vlaneseq
          %v591 = vshrl.u32 %v590, 7
          %v592 = vsub.s32 7, %v591
          %v593 = vrot.slane %v494, %v592
          %610 = vmatprep.subr.mxu0 %v496
          %611 = vmatpush1.xpose.msra.mxu0 %v495
          %612 = vmatprep.subr.mxu0 %v512
          %613 = vmatpush1.xpose.msra.mxu0 %v511
          %614 = vmatprep.subr.mxu0 0.0
          %615 = vmatpush1.xpose.msra.mxu0 0.0
          %616 = vmatprep.subr.mxu0 0.0
          %617 = vmatpush1.xpose.msra.mxu0 0.0
          %618 = vmatprep.subr.mxu0 0.0
          %619 = vmatpush1.xpose.msra.mxu0 0.0
          %620 = vmatprep.subr.mxu0 0.0
          %621 = vmatpush1.xpose.msra.mxu0 0.0
          %622 = vmatprep.subr.mxu0 0.0
          %623 = vmatpush1.xpose.msra.mxu0 0.0
          %624 = vmatprep.subr.mxu0 0.0
          %625 = vmatpush1.xpose.msra.mxu0 0.0
          %626 = vmatprep.subr.mxu0 0.0
          %627 = vmatpush1.xpose.msra.mxu0 0.0
          %628 = vmatprep.subr.mxu0 0.0
          %629 = vmatpush1.xpose.msra.mxu0 0.0
          %630 = vmatprep.subr.mxu0 0.0
          %631 = vmatpush1.xpose.msra.mxu0 0.0
          %632 = vmatprep.subr.mxu0 0.0
          %633 = vmatpush1.xpose.msra.mxu0 0.0
          %634 = vmatprep.subr.mxu0 0.0
          %635 = vmatpush1.xpose.msra.mxu0 0.0
          %636 = vmatprep.subr.mxu0 0.0
          %637 = vmatpush1.xpose.msra.mxu0 0.0
          %638 = vmatprep.subr.mxu0 0.0
          %639 = vmatpush1.xpose.msra.mxu0 0.0
          %640 = vmatprep.subr.mxu0 0.0
          %641 = vmatpush1.xpose.msra.mxu0 0.0
          %642 = vmatprep.subr.mxu0 0.0
          %643 = vmatpush1.xpose.msra.mxu0 0.0
          %644 = vmatprep.subr.mxu0 0.0
          %645 = vmatpush1.xpose.msra.mxu0 0.0
          %646 = vmatprep.subr.mxu0 0.0
          %647 = vmatpush1.xpose.msra.mxu0 0.0
          %648 = vmatprep.subr.mxu0 0.0
          %649 = vmatpush1.xpose.msra.mxu0 0.0
          %650 = vmatprep.subr.mxu0 0.0
          %651 = vmatpush1.xpose.msra.mxu0 0.0
          %652 = vmatprep.subr.mxu0 0.0
          %653 = vmatpush1.xpose.msra.mxu0 0.0
          %654 = vmatprep.subr.mxu0 0.0
          %655 = vmatpush1.xpose.msra.mxu0 0.0
          %656 = vmatprep.subr.mxu0 0.0
          %657 = vmatpush1.xpose.msra.mxu0 0.0
          %658 = vmatprep.subr.mxu0 0.0
          %659 = vmatpush1.xpose.msra.mxu0 0.0
          %660 = vmatprep.subr.mxu0 0.0
          %661 = vmatpush1.xpose.msra.mxu0 0.0
          %662 = vmatprep.subr.mxu0 0.0
          %663 = vmatpush1.xpose.msra.mxu0 0.0
          %664 = vmatprep.subr.mxu0 0.0
          %665 = vmatpush1.xpose.msra.mxu0 0.0
          %666 = vmatprep.subr.mxu0 0.0
          %667 = vmatpush1.xpose.msra.mxu0 0.0
          %668 = vmatprep.subr.mxu0 0.0
          %669 = vmatpush1.xpose.msra.mxu0 0.0
          %670 = vmatprep.subr.mxu0 0.0
          %671 = vmatpush1.xpose.msra.mxu0 0.0
          %672 = vmatprep.subr.mxu0 0.0
          %673 = vmatpush1.xpose.msra.mxu0 0.0
          %674 = vmatprep.mubr.f32.mxu0 %v537
          %675 = vmatmul.mubr.f32.gmra.mrb[0].mxu0 %v533
          %v676 = vpop.f32.mrb[0].mxu0
          %v677 = vadd.f32 %v527, %v676
          %v678 = vpop.f32.mrb[0].mxu0
          %679 = vdwg.mxu0
          %680 = vmatprep.subr.mxu0 %v498
          %681 = vmatpush1.xpose.msra.mxu0 %v497
          %682 = vmatprep.subr.mxu0 %v514
          %683 = vmatpush1.xpose.msra.mxu0 %v513
          %684 = vmatprep.subr.mxu0 0.0
          %685 = vmatpush1.xpose.msra.mxu0 0.0
          %686 = vmatprep.subr.mxu0 0.0
          %687 = vmatpush1.xpose.msra.mxu0 0.0
          %688 = vmatprep.subr.mxu0 0.0
          %689 = vmatpush1.xpose.msra.mxu0 0.0
          %690 = vmatprep.subr.mxu0 0.0
          %691 = vmatpush1.xpose.msra.mxu0 0.0
          %692 = vmatprep.subr.mxu0 0.0
          %693 = vmatpush1.xpose.msra.mxu0 0.0
          %694 = vmatprep.subr.mxu0 0.0
          %695 = vmatpush1.xpose.msra.mxu0 0.0
          %696 = vmatprep.subr.mxu0 0.0
          %697 = vmatpush1.xpose.msra.mxu0 0.0
          %698 = vmatprep.subr.mxu0 0.0
          %699 = vmatpush1.xpose.msra.mxu0 0.0
          %700 = vmatprep.subr.mxu0 0.0
          %701 = vmatpush1.xpose.msra.mxu0 0.0
          %702 = vmatprep.subr.mxu0 0.0
          %703 = vmatpush1.xpose.msra.mxu0 0.0
          %704 = vmatprep.subr.mxu0 0.0
          %705 = vmatpush1.xpose.msra.mxu0 0.0
          %706 = vmatprep.subr.mxu0 0.0
          %707 = vmatpush1.xpose.msra.mxu0 0.0
          %708 = vmatprep.subr.mxu0 0.0
          %709 = vmatpush1.xpose.msra.mxu0 0.0
          %710 = vmatprep.subr.mxu0 0.0
          %711 = vmatpush1.xpose.msra.mxu0 0.0
          %712 = vmatprep.subr.mxu0 0.0
          %713 = vmatpush1.xpose.msra.mxu0 0.0
          %714 = vmatprep.subr.mxu0 0.0
          %715 = vmatpush1.xpose.msra.mxu0 0.0
          %716 = vmatprep.subr.mxu0 0.0
          %717 = vmatpush1.xpose.msra.mxu0 0.0
          %718 = vmatprep.subr.mxu0 0.0
          %719 = vmatpush1.xpose.msra.mxu0 0.0
          %720 = vmatprep.subr.mxu0 0.0
          %721 = vmatpush1.xpose.msra.mxu0 0.0
          %722 = vmatprep.subr.mxu0 0.0
          %723 = vmatpush1.xpose.msra.mxu0 0.0
          %724 = vmatprep.subr.mxu0 0.0
          %725 = vmatpush1.xpose.msra.mxu0 0.0
          %726 = vmatprep.subr.mxu0 0.0
          %727 = vmatpush1.xpose.msra.mxu0 0.0
          %728 = vmatprep.subr.mxu0 0.0
          %729 = vmatpush1.xpose.msra.mxu0 0.0
          %730 = vmatprep.subr.mxu0 0.0
          %731 = vmatpush1.xpose.msra.mxu0 0.0
          %732 = vmatprep.subr.mxu0 0.0
          %733 = vmatpush1.xpose.msra.mxu0 0.0
          %734 = vmatprep.subr.mxu0 0.0
          %735 = vmatpush1.xpose.msra.mxu0 0.0
          %736 = vmatprep.subr.mxu0 0.0
          %737 = vmatpush1.xpose.msra.mxu0 0.0
          %738 = vmatprep.subr.mxu0 0.0
          %739 = vmatpush1.xpose.msra.mxu0 0.0
          %740 = vmatprep.subr.mxu0 0.0
          %741 = vmatpush1.xpose.msra.mxu0 0.0
          %742 = vmatprep.subr.mxu0 0.0
          %743 = vmatpush1.xpose.msra.mxu0 0.0
          %744 = vmatprep.mubr.f32.mxu0 %v545
          %745 = vmatmul.mubr.f32.gmra.mrb[0].mxu0 %v541
          %v746 = vpop.f32.mrb[0].mxu0
          %v747 = vadd.f32 %v677, %v746
          %v748 = vpop.f32.mrb[0].mxu0
          %749 = vdwg.mxu0
          %750 = vmatprep.subr.mxu0 %v500
          %751 = vmatpush1.xpose.msra.mxu0 %v499
          %752 = vmatprep.subr.mxu0 %v516
          %753 = vmatpush1.xpose.msra.mxu0 %v515
          %754 = vmatprep.subr.mxu0 0.0
          %755 = vmatpush1.xpose.msra.mxu0 0.0
          %756 = vmatprep.subr.mxu0 0.0
          %757 = vmatpush1.xpose.msra.mxu0 0.0
          %758 = vmatprep.subr.mxu0 0.0
          %759 = vmatpush1.xpose.msra.mxu0 0.0
          %760 = vmatprep.subr.mxu0 0.0
          %761 = vmatpush1.xpose.msra.mxu0 0.0
          %762 = vmatprep.subr.mxu0 0.0
          %763 = vmatpush1.xpose.msra.mxu0 0.0
          %764 = vmatprep.subr.mxu0 0.0
          %765 = vmatpush1.xpose.msra.mxu0 0.0
          %766 = vmatprep.subr.mxu0 0.0
          %767 = vmatpush1.xpose.msra.mxu0 0.0
          %768 = vmatprep.subr.mxu0 0.0
          %769 = vmatpush1.xpose.msra.mxu0 0.0
          %770 = vmatprep.subr.mxu0 0.0
          %771 = vmatpush1.xpose.msra.mxu0 0.0
          %772 = vmatprep.subr.mxu0 0.0
          %773 = vmatpush1.xpose.msra.mxu0 0.0
          %774 = vmatprep.subr.mxu0 0.0
          %775 = vmatpush1.xpose.msra.mxu0 0.0
          %776 = vmatprep.subr.mxu0 0.0
          %777 = vmatpush1.xpose.msra.mxu0 0.0
          %778 = vmatprep.subr.mxu0 0.0
          %779 = vmatpush1.xpose.msra.mxu0 0.0
          %780 = vmatprep.subr.mxu0 0.0
          %781 = vmatpush1.xpose.msra.mxu0 0.0
          %782 = vmatprep.subr.mxu0 0.0
          %783 = vmatpush1.xpose.msra.mxu0 0.0
          %784 = vmatprep.subr.mxu0 0.0
          %785 = vmatpush1.xpose.msra.mxu0 0.0
          %786 = vmatprep.subr.mxu0 0.0
          %787 = vmatpush1.xpose.msra.mxu0 0.0
          %788 = vmatprep.subr.mxu0 0.0
          %789 = vmatpush1.xpose.msra.mxu0 0.0
          %790 = vmatprep.subr.mxu0 0.0
          %791 = vmatpush1.xpose.msra.mxu0 0.0
          %792 = vmatprep.subr.mxu0 0.0
          %793 = vmatpush1.xpose.msra.mxu0 0.0
          %794 = vmatprep.subr.mxu0 0.0
          %795 = vmatpush1.xpose.msra.mxu0 0.0
          %796 = vmatprep.subr.mxu0 0.0
          %797 = vmatpush1.xpose.msra.mxu0 0.0
          %798 = vmatprep.subr.mxu0 0.0
          %799 = vmatpush1.xpose.msra.mxu0 0.0
          %800 = vmatprep.subr.mxu0 0.0
          %801 = vmatpush1.xpose.msra.mxu0 0.0
          %802 = vmatprep.subr.mxu0 0.0
          %803 = vmatpush1.xpose.msra.mxu0 0.0
          %804 = vmatprep.subr.mxu0 0.0
          %805 = vmatpush1.xpose.msra.mxu0 0.0
          %806 = vmatprep.subr.mxu0 0.0
          %807 = vmatpush1.xpose.msra.mxu0 0.0
          %808 = vmatprep.subr.mxu0 0.0
          %809 = vmatpush1.xpose.msra.mxu0 0.0
          %810 = vmatprep.subr.mxu0 0.0
          %811 = vmatpush1.xpose.msra.mxu0 0.0
          %812 = vmatprep.subr.mxu0 0.0
          %813 = vmatpush1.xpose.msra.mxu0 0.0
          %814 = vmatprep.mubr.f32.mxu0 %v553
          %815 = vmatmul.mubr.f32.gmra.mrb[0].mxu0 %v549
          %v816 = vpop.f32.mrb[0].mxu0
          %v817 = vadd.f32 %v747, %v816
          %v818 = vpop.f32.mrb[0].mxu0
          %819 = vdwg.mxu0
          %820 = vmatprep.subr.mxu0 %v502
          %821 = vmatpush1.xpose.msra.mxu0 %v501
          %822 = vmatprep.subr.mxu0 %v518
          %823 = vmatpush1.xpose.msra.mxu0 %v517
          %824 = vmatprep.subr.mxu0 0.0
          %825 = vmatpush1.xpose.msra.mxu0 0.0
          %826 = vmatprep.subr.mxu0 0.0
          %827 = vmatpush1.xpose.msra.mxu0 0.0
          %828 = vmatprep.subr.mxu0 0.0
          %829 = vmatpush1.xpose.msra.mxu0 0.0
          %830 = vmatprep.subr.mxu0 0.0
          %831 = vmatpush1.xpose.msra.mxu0 0.0
          %832 = vmatprep.subr.mxu0 0.0
          %833 = vmatpush1.xpose.msra.mxu0 0.0
          %834 = vmatprep.subr.mxu0 0.0
          %835 = vmatpush1.xpose.msra.mxu0 0.0
          %836 = vmatprep.subr.mxu0 0.0
          %837 = vmatpush1.xpose.msra.mxu0 0.0
          %838 = vmatprep.subr.mxu0 0.0
          %839 = vmatpush1.xpose.msra.mxu0 0.0
          %840 = vmatprep.subr.mxu0 0.0
          %841 = vmatpush1.xpose.msra.mxu0 0.0
          %842 = vmatprep.subr.mxu0 0.0
          %843 = vmatpush1.xpose.msra.mxu0 0.0
          %844 = vmatprep.subr.mxu0 0.0
          %845 = vmatpush1.xpose.msra.mxu0 0.0
          %846 = vmatprep.subr.mxu0 0.0
          %847 = vmatpush1.xpose.msra.mxu0 0.0
          %848 = vmatprep.subr.mxu0 0.0
          %849 = vmatpush1.xpose.msra.mxu0 0.0
          %850 = vmatprep.subr.mxu0 0.0
          %851 = vmatpush1.xpose.msra.mxu0 0.0
          %852 = vmatprep.subr.mxu0 0.0
          %853 = vmatpush1.xpose.msra.mxu0 0.0
          %854 = vmatprep.subr.mxu0 0.0
          %855 = vmatpush1.xpose.msra.mxu0 0.0
          %856 = vmatprep.subr.mxu0 0.0
          %857 = vmatpush1.xpose.msra.mxu0 0.0
          %858 = vmatprep.subr.mxu0 0.0
          %859 = vmatpush1.xpose.msra.mxu0 0.0
          %860 = vmatprep.subr.mxu0 0.0
          %861 = vmatpush1.xpose.msra.mxu0 0.0
          %862 = vmatprep.subr.mxu0 0.0
          %863 = vmatpush1.xpose.msra.mxu0 0.0
          %864 = vmatprep.subr.mxu0 0.0
          %865 = vmatpush1.xpose.msra.mxu0 0.0
          %866 = vmatprep.subr.mxu0 0.0
          %867 = vmatpush1.xpose.msra.mxu0 0.0
          %868 = vmatprep.subr.mxu0 0.0
          %869 = vmatpush1.xpose.msra.mxu0 0.0
          %870 = vmatprep.subr.mxu0 0.0
          %871 = vmatpush1.xpose.msra.mxu0 0.0
          %872 = vmatprep.subr.mxu0 0.0
          %873 = vmatpush1.xpose.msra.mxu0 0.0
          %874 = vmatprep.subr.mxu0 0.0
          %875 = vmatpush1.xpose.msra.mxu0 0.0
          %876 = vmatprep.subr.mxu0 0.0
          %877 = vmatpush1.xpose.msra.mxu0 0.0
          %878 = vmatprep.subr.mxu0 0.0
          %879 = vmatpush1.xpose.msra.mxu0 0.0
          %880 = vmatprep.subr.mxu0 0.0
          %881 = vmatpush1.xpose.msra.mxu0 0.0
          %882 = vmatprep.subr.mxu0 0.0
          %883 = vmatpush1.xpose.msra.mxu0 0.0
          %884 = vmatprep.mubr.f32.mxu0 %v561
          %885 = vmatmul.mubr.f32.gmra.mrb[0].mxu0 %v557
          %v886 = vpop.f32.mrb[0].mxu0
          %v887 = vadd.f32 %v817, %v886
          %v888 = vpop.f32.mrb[0].mxu0
          %889 = vdwg.mxu0
          %890 = vmatprep.subr.mxu0 %v504
          %891 = vmatpush1.xpose.msra.mxu0 %v503
          %892 = vmatprep.subr.mxu0 %v520
          %893 = vmatpush1.xpose.msra.mxu0 %v519
          %894 = vmatprep.subr.mxu0 0.0
          %895 = vmatpush1.xpose.msra.mxu0 0.0
          %896 = vmatprep.subr.mxu0 0.0
          %897 = vmatpush1.xpose.msra.mxu0 0.0
          %898 = vmatprep.subr.mxu0 0.0
          %899 = vmatpush1.xpose.msra.mxu0 0.0
          %900 = vmatprep.subr.mxu0 0.0
          %901 = vmatpush1.xpose.msra.mxu0 0.0
          %902 = vmatprep.subr.mxu0 0.0
          %903 = vmatpush1.xpose.msra.mxu0 0.0
          %904 = vmatprep.subr.mxu0 0.0
          %905 = vmatpush1.xpose.msra.mxu0 0.0
          %906 = vmatprep.subr.mxu0 0.0
          %907 = vmatpush1.xpose.msra.mxu0 0.0
          %908 = vmatprep.subr.mxu0 0.0
          %909 = vmatpush1.xpose.msra.mxu0 0.0
          %910 = vmatprep.subr.mxu0 0.0
          %911 = vmatpush1.xpose.msra.mxu0 0.0
          %912 = vmatprep.subr.mxu0 0.0
          %913 = vmatpush1.xpose.msra.mxu0 0.0
          %914 = vmatprep.subr.mxu0 0.0
          %915 = vmatpush1.xpose.msra.mxu0 0.0
          %916 = vmatprep.subr.mxu0 0.0
          %917 = vmatpush1.xpose.msra.mxu0 0.0
          %918 = vmatprep.subr.mxu0 0.0
          %919 = vmatpush1.xpose.msra.mxu0 0.0
          %920 = vmatprep.subr.mxu0 0.0
          %921 = vmatpush1.xpose.msra.mxu0 0.0
          %922 = vmatprep.subr.mxu0 0.0
          %923 = vmatpush1.xpose.msra.mxu0 0.0
          %924 = vmatprep.subr.mxu0 0.0
          %925 = vmatpush1.xpose.msra.mxu0 0.0
          %926 = vmatprep.subr.mxu0 0.0
          %927 = vmatpush1.xpose.msra.mxu0 0.0
          %928 = vmatprep.subr.mxu0 0.0
          %929 = vmatpush1.xpose.msra.mxu0 0.0
          %930 = vmatprep.subr.mxu0 0.0
          %931 = vmatpush1.xpose.msra.mxu0 0.0
          %932 = vmatprep.subr.mxu0 0.0
          %933 = vmatpush1.xpose.msra.mxu0 0.0
          %934 = vmatprep.subr.mxu0 0.0
          %935 = vmatpush1.xpose.msra.mxu0 0.0
          %936 = vmatprep.subr.mxu0 0.0
          %937 = vmatpush1.xpose.msra.mxu0 0.0
          %938 = vmatprep.subr.mxu0 0.0
          %939 = vmatpush1.xpose.msra.mxu0 0.0
          %940 = vmatprep.subr.mxu0 0.0
          %941 = vmatpush1.xpose.msra.mxu0 0.0
          %942 = vmatprep.subr.mxu0 0.0
          %943 = vmatpush1.xpose.msra.mxu0 0.0
          %944 = vmatprep.subr.mxu0 0.0
          %945 = vmatpush1.xpose.msra.mxu0 0.0
          %946 = vmatprep.subr.mxu0 0.0
          %947 = vmatpush1.xpose.msra.mxu0 0.0
          %948 = vmatprep.subr.mxu0 0.0
          %949 = vmatpush1.xpose.msra.mxu0 0.0
          %950 = vmatprep.subr.mxu0 0.0
          %951 = vmatpush1.xpose.msra.mxu0 0.0
          %952 = vmatprep.subr.mxu0 0.0
          %953 = vmatpush1.xpose.msra.mxu0 0.0
          %954 = vmatprep.mubr.f32.mxu0 %v569
          %955 = vmatmul.mubr.f32.gmra.mrb[0].mxu0 %v565
          %v956 = vpop.f32.mrb[0].mxu0
          %v957 = vadd.f32 %v887, %v956
          %v958 = vpop.f32.mrb[0].mxu0
          %959 = vdwg.mxu0
          %960 = vmatprep.subr.mxu0 %v506
          %961 = vmatpush1.xpose.msra.mxu0 %v505
          %962 = vmatprep.subr.mxu0 %v522
          %963 = vmatpush1.xpose.msra.mxu0 %v521
          %964 = vmatprep.subr.mxu0 0.0
          %965 = vmatpush1.xpose.msra.mxu0 0.0
          %966 = vmatprep.subr.mxu0 0.0
          %967 = vmatpush1.xpose.msra.mxu0 0.0
          %968 = vmatprep.subr.mxu0 0.0
          %969 = vmatpush1.xpose.msra.mxu0 0.0
          %970 = vmatprep.subr.mxu0 0.0
          %971 = vmatpush1.xpose.msra.mxu0 0.0
          %972 = vmatprep.subr.mxu0 0.0
          %973 = vmatpush1.xpose.msra.mxu0 0.0
          %974 = vmatprep.subr.mxu0 0.0
          %975 = vmatpush1.xpose.msra.mxu0 0.0
          %976 = vmatprep.subr.mxu0 0.0
          %977 = vmatpush1.xpose.msra.mxu0 0.0
          %978 = vmatprep.subr.mxu0 0.0
          %979 = vmatpush1.xpose.msra.mxu0 0.0
          %980 = vmatprep.subr.mxu0 0.0
          %981 = vmatpush1.xpose.msra.mxu0 0.0
          %982 = vmatprep.subr.mxu0 0.0
          %983 = vmatpush1.xpose.msra.mxu0 0.0
          %984 = vmatprep.subr.mxu0 0.0
          %985 = vmatpush1.xpose.msra.mxu0 0.0
          %986 = vmatprep.subr.mxu0 0.0
          %987 = vmatpush1.xpose.msra.mxu0 0.0
          %988 = vmatprep.subr.mxu0 0.0
          %989 = vmatpush1.xpose.msra.mxu0 0.0
          %990 = vmatprep.subr.mxu0 0.0
          %991 = vmatpush1.xpose.msra.mxu0 0.0
          %992 = vmatprep.subr.mxu0 0.0
          %993 = vmatpush1.xpose.msra.mxu0 0.0
          %994 = vmatprep.subr.mxu0 0.0
          %995 = vmatpush1.xpose.msra.mxu0 0.0
          %996 = vmatprep.subr.mxu0 0.0
          %997 = vmatpush1.xpose.msra.mxu0 0.0
          %998 = vmatprep.subr.mxu0 0.0
          %999 = vmatpush1.xpose.msra.mxu0 0.0
          %1000 = vmatprep.subr.mxu0 0.0
          %1001 = vmatpush1.xpose.msra.mxu0 0.0
          %1002 = vmatprep.subr.mxu0 0.0
          %1003 = vmatpush1.xpose.msra.mxu0 0.0
          %1004 = vmatprep.subr.mxu0 0.0
          %1005 = vmatpush1.xpose.msra.mxu0 0.0
          %1006 = vmatprep.subr.mxu0 0.0
          %1007 = vmatpush1.xpose.msra.mxu0 0.0
          %1008 = vmatprep.subr.mxu0 0.0
          %1009 = vmatpush1.xpose.msra.mxu0 0.0
          %1010 = vmatprep.subr.mxu0 0.0
          %1011 = vmatpush1.xpose.msra.mxu0 0.0
          %1012 = vmatprep.subr.mxu0 0.0
          %1013 = vmatpush1.xpose.msra.mxu0 0.0
          %1014 = vmatprep.subr.mxu0 0.0
          %1015 = vmatpush1.xpose.msra.mxu0 0.0
          %1016 = vmatprep.subr.mxu0 0.0
          %1017 = vmatpush1.xpose.msra.mxu0 0.0
          %1018 = vmatprep.subr.mxu0 0.0
          %1019 = vmatpush1.xpose.msra.mxu0 0.0
          %1020 = vmatprep.subr.mxu0 0.0
          %1021 = vmatpush1.xpose.msra.mxu0 0.0
          %1022 = vmatprep.subr.mxu0 0.0
          %1023 = vmatpush1.xpose.msra.mxu0 0.0
          %1024 = vmatprep.mubr.f32.mxu0 %v577
          %1025 = vmatmul.mubr.f32.gmra.mrb[0].mxu0 %v573
          %v1026 = vpop.f32.mrb[0].mxu0
          %v1027 = vadd.f32 %v957, %v1026
          %v1028 = vpop.f32.mrb[0].mxu0
          %1029 = vdwg.mxu0
          %1030 = vmatprep.subr.mxu0 %v508
          %1031 = vmatpush1.xpose.msra.mxu0 %v507
          %1032 = vmatprep.subr.mxu0 %v524
          %1033 = vmatpush1.xpose.msra.mxu0 %v523
          %1034 = vmatprep.subr.mxu0 0.0
          %1035 = vmatpush1.xpose.msra.mxu0 0.0
          %1036 = vmatprep.subr.mxu0 0.0
          %1037 = vmatpush1.xpose.msra.mxu0 0.0
          %1038 = vmatprep.subr.mxu0 0.0
          %1039 = vmatpush1.xpose.msra.mxu0 0.0
          %1040 = vmatprep.subr.mxu0 0.0
          %1041 = vmatpush1.xpose.msra.mxu0 0.0
          %1042 = vmatprep.subr.mxu0 0.0
          %1043 = vmatpush1.xpose.msra.mxu0 0.0
          %1044 = vmatprep.subr.mxu0 0.0
          %1045 = vmatpush1.xpose.msra.mxu0 0.0
          %1046 = vmatprep.subr.mxu0 0.0
          %1047 = vmatpush1.xpose.msra.mxu0 0.0
          %1048 = vmatprep.subr.mxu0 0.0
          %1049 = vmatpush1.xpose.msra.mxu0 0.0
          %1050 = vmatprep.subr.mxu0 0.0
          %1051 = vmatpush1.xpose.msra.mxu0 0.0
          %1052 = vmatprep.subr.mxu0 0.0
          %1053 = vmatpush1.xpose.msra.mxu0 0.0
          %1054 = vmatprep.subr.mxu0 0.0
          %1055 = vmatpush1.xpose.msra.mxu0 0.0
          %1056 = vmatprep.subr.mxu0 0.0
          %1057 = vmatpush1.xpose.msra.mxu0 0.0
          %1058 = vmatprep.subr.mxu0 0.0
          %1059 = vmatpush1.xpose.msra.mxu0 0.0
          %1060 = vmatprep.subr.mxu0 0.0
          %1061 = vmatpush1.xpose.msra.mxu0 0.0
          %1062 = vmatprep.subr.mxu0 0.0
          %1063 = vmatpush1.xpose.msra.mxu0 0.0
          %1064 = vmatprep.subr.mxu0 0.0
          %1065 = vmatpush1.xpose.msra.mxu0 0.0
          %1066 = vmatprep.subr.mxu0 0.0
          %1067 = vmatpush1.xpose.msra.mxu0 0.0
          %1068 = vmatprep.subr.mxu0 0.0
          %1069 = vmatpush1.xpose.msra.mxu0 0.0
          %1070 = vmatprep.subr.mxu0 0.0
          %1071 = vmatpush1.xpose.msra.mxu0 0.0
          %1072 = vmatprep.subr.mxu0 0.0
          %1073 = vmatpush1.xpose.msra.mxu0 0.0
          %1074 = vmatprep.subr.mxu0 0.0
          %1075 = vmatpush1.xpose.msra.mxu0 0.0
          %1076 = vmatprep.subr.mxu0 0.0
          %1077 = vmatpush1.xpose.msra.mxu0 0.0
          %1078 = vmatprep.subr.mxu0 0.0
          %1079 = vmatpush1.xpose.msra.mxu0 0.0
          %1080 = vmatprep.subr.mxu0 0.0
          %1081 = vmatpush1.xpose.msra.mxu0 0.0
          %1082 = vmatprep.subr.mxu0 0.0
          %1083 = vmatpush1.xpose.msra.mxu0 0.0
          %1084 = vmatprep.subr.mxu0 0.0
          %1085 = vmatpush1.xpose.msra.mxu0 0.0
          %1086 = vmatprep.subr.mxu0 0.0
          %1087 = vmatpush1.xpose.msra.mxu0 0.0
          %1088 = vmatprep.subr.mxu0 0.0
          %1089 = vmatpush1.xpose.msra.mxu0 0.0
          %1090 = vmatprep.subr.mxu0 0.0
          %1091 = vmatpush1.xpose.msra.mxu0 0.0
          %1092 = vmatprep.subr.mxu0 0.0
          %1093 = vmatpush1.xpose.msra.mxu0 0.0
          %1094 = vmatprep.mubr.f32.mxu0 %v585
          %1095 = vmatmul.mubr.f32.gmra.mrb[0].mxu0 %v581
          %v1096 = vpop.f32.mrb[0].mxu0
          %v1097 = vadd.f32 %v1027, %v1096
          %v1098 = vpop.f32.mrb[0].mxu0
          %1099 = vdwg.mxu0
          %1100 = vmatprep.subr.mxu0 %v510
          %1101 = vmatpush1.xpose.msra.mxu0 %v509
          %1102 = vmatprep.subr.mxu0 %v526
          %1103 = vmatpush1.xpose.msra.mxu0 %v525
          %1104 = vmatprep.subr.mxu0 0.0
          %1105 = vmatpush1.xpose.msra.mxu0 0.0
          %1106 = vmatprep.subr.mxu0 0.0
          %1107 = vmatpush1.xpose.msra.mxu0 0.0
          %1108 = vmatprep.subr.mxu0 0.0
          %1109 = vmatpush1.xpose.msra.mxu0 0.0
          %1110 = vmatprep.subr.mxu0 0.0
          %1111 = vmatpush1.xpose.msra.mxu0 0.0
          %1112 = vmatprep.subr.mxu0 0.0
          %1113 = vmatpush1.xpose.msra.mxu0 0.0
          %1114 = vmatprep.subr.mxu0 0.0
          %1115 = vmatpush1.xpose.msra.mxu0 0.0
          %1116 = vmatprep.subr.mxu0 0.0
          %1117 = vmatpush1.xpose.msra.mxu0 0.0
          %1118 = vmatprep.subr.mxu0 0.0
          %1119 = vmatpush1.xpose.msra.mxu0 0.0
          %1120 = vmatprep.subr.mxu0 0.0
          %1121 = vmatpush1.xpose.msra.mxu0 0.0
          %1122 = vmatprep.subr.mxu0 0.0
          %1123 = vmatpush1.xpose.msra.mxu0 0.0
          %1124 = vmatprep.subr.mxu0 0.0
          %1125 = vmatpush1.xpose.msra.mxu0 0.0
          %1126 = vmatprep.subr.mxu0 0.0
          %1127 = vmatpush1.xpose.msra.mxu0 0.0
          %1128 = vmatprep.subr.mxu0 0.0
          %1129 = vmatpush1.xpose.msra.mxu0 0.0
          %1130 = vmatprep.subr.mxu0 0.0
          %1131 = vmatpush1.xpose.msra.mxu0 0.0
          %1132 = vmatprep.subr.mxu0 0.0
          %1133 = vmatpush1.xpose.msra.mxu0 0.0
          %1134 = vmatprep.subr.mxu0 0.0
          %1135 = vmatpush1.xpose.msra.mxu0 0.0
          %1136 = vmatprep.subr.mxu0 0.0
          %1137 = vmatpush1.xpose.msra.mxu0 0.0
          %1138 = vmatprep.subr.mxu0 0.0
          %1139 = vmatpush1.xpose.msra.mxu0 0.0
          %1140 = vmatprep.subr.mxu0 0.0
          %1141 = vmatpush1.xpose.msra.mxu0 0.0
          %1142 = vmatprep.subr.mxu0 0.0
          %1143 = vmatpush1.xpose.msra.mxu0 0.0
          %1144 = vmatprep.subr.mxu0 0.0
          %1145 = vmatpush1.xpose.msra.mxu0 0.0
          %1146 = vmatprep.subr.mxu0 0.0
          %1147 = vmatpush1.xpose.msra.mxu0 0.0
          %1148 = vmatprep.subr.mxu0 0.0
          %1149 = vmatpush1.xpose.msra.mxu0 0.0
          %1150 = vmatprep.subr.mxu0 0.0
          %1151 = vmatpush1.xpose.msra.mxu0 0.0
          %1152 = vmatprep.subr.mxu0 0.0
          %1153 = vmatpush1.xpose.msra.mxu0 0.0
          %1154 = vmatprep.subr.mxu0 0.0
          %1155 = vmatpush1.xpose.msra.mxu0 0.0
          %1156 = vmatprep.subr.mxu0 0.0
          %1157 = vmatpush1.xpose.msra.mxu0 0.0
          %1158 = vmatprep.subr.mxu0 0.0
          %1159 = vmatpush1.xpose.msra.mxu0 0.0
          %1160 = vmatprep.subr.mxu0 0.0
          %1161 = vmatpush1.xpose.msra.mxu0 0.0
          %1162 = vmatprep.subr.mxu0 0.0
          %1163 = vmatpush1.xpose.msra.mxu0 0.0
          %1164 = vmatprep.mubr.f32.mxu0 %v593
          %1165 = vmatmul.mubr.f32.gmra.mrb[0].mxu0 %v589
          %v1166 = vpop.f32.mrb[0].mxu0
          %v1167 = vadd.f32 %v1097, %v1166
          %v1168 = vpop.f32.mrb[0].mxu0
          %1169 = vdwg.mxu0
          %vm1170 = vcmask 114688
          %v1171 = vsel %vm1170, %v1167, -inf
          %1172 = vmax.xlane.f32.xlu0 %v1171
          %v1173 = vpop.xlane.xlu0 %1172
          %v1174 = vsub.f32 %v1167, %v1173
          %v1175 = vmul.f32 %v1174, 1.442695
          %v1176 = vpow.pop %v1175
          %v1177 = vsel %vm1170, %v1176, 0.0
          %1178 = vadd.xlane.f32.xlu0 %v1177
          %v1179 = vpop.xlane.xlu0 %1178
          %v1180 = vlog2.pop %v1179
          %v1181 = vmul.f32 %v1180, 0.6931472
          %v1182 = vsub.f32 %v1174, %v1181
          %1183 = vst.msk [vmem:[%s216] sm:$0x1] %vm1170, %v1182
        $region48: #{tpu_custom_call.1} parent=31 // pred_fallthru
          _
        %s1184 = sand.u32 %s111, 1
        %s1185 = scalar_lea.sflag [#allocation5], %s1184
        %s1186 = sand.u32 %s111, 1
        %s1187 = scalar_lea.vmem [#allocation8], %s1186
        // Predicated region
        $region49: #{tpu_custom_call.1} parent=31 // pred_check
          %p1188 = pneg %p121
        $region50: #{tpu_custom_call.1} parent=31 // pred_check_branch
          %1190 = sbr.rel (%p1188) target = $region52
        $region51: #{tpu_custom_call.1} parent=31 // pred_region
          %s1192 = ssub.s32 16, 16
          %1193 = vsyncadd %s1185, %s1192
          %s1194 = smul.addr %s25, 16
          %s1195 = scalar_lea.hbm %s3, %s1194
          %s1197 = sshll.u32 %s1187, 4
          %s1198 = int_to_ptr.vmem [resolvable:$true] %s1197
          %1200 = dma.vmem_to_hbm [thread:$0]  %s1198, 16, %s1195, %s1185
        $region52: #{tpu_custom_call.1} parent=31 // pred_fallthru
          _
      $region32: #{tpu_custom_call.1} parent=5 // pred_fallthru
        _
      %p1201 = scmp.le.s32.totalorder 2, %s16
      // Predicated region
      $region53: #{tpu_custom_call.1} parent=5 // pred_check
        %p1202 = pneg %p1201
      $region54: #{tpu_custom_call.1} parent=5 // pred_check_branch
        %1204 = sbr.rel (%p1202) target = $region56
      $region55: #{tpu_custom_call.1} parent=5 // pred_region
        %s1205 = ssub.s32 %s16, 2
        // Predicated region
        $region57: #{tpu_custom_call.1} parent=55 // pred_check
          %p1206 = pneg %p127
        $region58: #{tpu_custom_call.1} parent=55 // pred_check_branch
          %1208 = sbr.rel (%p1206) target = $region60
        $region59: #{tpu_custom_call.1} parent=55 // pred_region
          %s1209 = sand.u32 %s112, 1
          %s1210 = scalar_lea.sflag [#allocation5], %s1209
          %s1211 = sand.u32 %s112, 1
          %s1212 = scalar_lea.vmem [#allocation8], %s1211
          %1213 = dma.done %s1210, 16
        $region60: #{tpu_custom_call.1} parent=55 // pred_fallthru
          _
      $region56: #{tpu_custom_call.1} parent=5 // pred_fallthru
        _
    $region6: #{tpu_custom_call.1} parent=1 // loop_footer
      %s20 = sadd.s32 1, %s16
    $region7: #{tpu_custom_call.1} parent=1 // loop_footer_branch
      %15 = sbr.rel target = $region3
    $region8: #{tpu_custom_call.1} parent=1 // loop_exit
      _
    %1214 = vsyncpa [#allocation4], 1
    %s1215 = scalar_lea.sflag [#allocation4], 1
    %1216 = vsyncpa %s1215, 1
    %1217 = vsyncpa [#allocation7], 1
    %1218 = vsyncpa [#allocation5], 1
    %s1219 = scalar_lea.sflag [#allocation5], 1
    %1220 = vsyncpa %s1219, 1

</llo_original>
